<compile_context>
chip_gen: v5e
topology: v5e:2x2
jax: 0.10.0
libtpu: 0.0.40
codegen_flags: <defaults>
</compile_context>

<pallas_src>
import functools

import jax
import jax.numpy as jnp
from jax.experimental import pallas as pl
from jax.experimental.pallas import tpu as pltpu

LANE = 128
SUBLANE = 8


def _round_up(n, m):
    return ((n + m - 1) // m) * m


def _mlp_kernel(x_ref, b_ref,
                w1_ref, w2_ref, w3_ref, w4_ref, w5_ref,
                o_ref, *, activation: bool, compute_dtype):
    """One batch tile through the whole 5-layer MLP."""

    def linear(h, w_ref, layer):
        n_out = w_ref.shape[1]
        # MXU matmul in compute_dtype, accumulate in f32.
        acc = jnp.dot(h.astype(compute_dtype), w_ref[...],
                      preferred_element_type=jnp.float32)
        # Packed biases: row (layer-1) holds that layer's bias, zero-padded.
        return acc + b_ref[layer - 1:layer, :n_out]

    h = x_ref[...]
    h = jnp.maximum(linear(h, w1_ref, 1), 0.0)   # f32 elementwise (v5e-safe)
    h = jnp.maximum(linear(h, w2_ref, 2), 0.0)
    h = jnp.maximum(linear(h, w3_ref, 3), 0.0)
    h = jnp.maximum(linear(h, w4_ref, 4), 0.0)
    out = linear(h, w5_ref, 5)
    if activation:
        out = jnp.tanh(out)                      # EUP
    o_ref[...] = (3.0 * out).astype(o_ref.dtype)


def mlp_forward(x, params, *, activation: bool,
                batch_tile: int | None = None,
                compute_dtype=jnp.bfloat16):
    """Run the 5-layer MLP forward pass in a single Pallas TPU kernel.

    x: (B, in_dim) float32
    params: dict with w1..w5 of shape (in, out) and b1..b5 of shape (1, out)
    """
    B, in_dim = x.shape
    width = params["w1"].shape[1]
    out_dim = params["w5"].shape[1]

    # ---- lane-dense padded feature dims -----------------------------------
    in_p = _round_up(in_dim, LANE)
    w_p = _round_up(width, LANE)
    out_p = _round_up(out_dim, LANE)
    max_p = max(w_p, out_p)

    # ---- batch tiling (real tiles -> pipelined grid, v7x core sharding) ---
    if batch_tile is None:
        tb = min(256, _round_up(B, SUBLANE))
    else:
        tb = batch_tile
    tb = _round_up(tb, SUBLANE)
    B_pad = _round_up(B, tb)
    grid = (B_pad // tb,)

    itemsize = jnp.dtype(compute_dtype).itemsize

    # ---- pad + cast weights (zeros in padded rows/cols keep math exact) ---
    def pad_w(w, rows, cols):
        return jnp.pad(
            w, ((0, rows - w.shape[0]), (0, cols - w.shape[1]))
        ).astype(compute_dtype)

    w1 = pad_w(params["w1"], in_p, w_p)
    w2 = pad_w(params["w2"], w_p, w_p)
    w3 = pad_w(params["w3"], w_p, w_p)
    w4 = pad_w(params["w4"], w_p, w_p)
    w5 = pad_w(params["w5"], w_p, out_p)
    weights = (w1, w2, w3, w4, w5)

    # ---- pack the 5 biases into one (8, max_p) f32 block ------------------
    b_packed = jnp.zeros((SUBLANE, max_p), jnp.float32)
    for layer in range(1, 6):
        b = params[f"b{layer}"].reshape(-1).astype(jnp.float32)
        b_packed = b_packed.at[layer - 1, :b.shape[0]].set(b)

    # ---- pad x (batch + features) and cast for the MXU --------------------
    x_pad = jnp.pad(x, ((0, B_pad - B), (0, in_p - in_dim))).astype(compute_dtype)

    # ---- specs -------------------------------------------------------------
    x_spec = pl.BlockSpec((tb, in_p), lambda i: (i, 0))
    b_spec = pl.BlockSpec((SUBLANE, max_p), lambda i: (0, 0))
    w_specs = [pl.BlockSpec(w.shape, lambda i: (0, 0)) for w in weights]
    out_spec = pl.BlockSpec((tb, out_p), lambda i: (i, 0))

    # ---- advisory cost estimate --------------------------------------------
    flops = 2 * B * (in_dim * width + 3 * width * width + width * out_dim)
    transcendentals = B * out_dim if activation else 0
    weight_bytes = sum(int(w.size) for w in weights) * itemsize
    bytes_accessed = (int(x_pad.size) * itemsize
                      + B_pad * out_p * x.dtype.itemsize
                      + weight_bytes
                      + int(b_packed.size) * 4)
    cost = pl.CostEstimate(flops=flops,
                           transcendentals=transcendentals,
                           bytes_accessed=bytes_accessed)

    # ---- VMEM budget: raise the scoped limit only if needed (v7x: 64 MiB) --
    # NOTE: for very large widths, single-buffering the grid-invariant weight
    # blocks (pipeline_mode=pl.Buffered(1)) would halve resident weight VMEM.
    vmem_est = (2 * weight_bytes                           # double-buffered weights
                + 2 * tb * in_p * itemsize                 # x blocks
                + 2 * tb * out_p * x.dtype.itemsize        # out blocks
                + int(b_packed.size) * 4
                + 4 * tb * w_p * 4)                        # live f32 intermediates
    vmem_limit = None
    if vmem_est > 30 * 1024 * 1024:
        vmem_limit = min(int(vmem_est * 1.25), 100 * 1024 * 1024)

    kernel = functools.partial(_mlp_kernel, activation=activation,
                               compute_dtype=compute_dtype)

    out_padded = pl.pallas_call(
        kernel,
        out_shape=jax.ShapeDtypeStruct((B_pad, out_p), x.dtype),
        grid_spec=pltpu.PrefetchScalarGridSpec(
            num_scalar_prefetch=0,
            grid=grid,
            in_specs=[x_spec, b_spec] + w_specs,
            out_specs=out_spec,
        ),
        compiler_params=pltpu.CompilerParams(
            dimension_semantics=("parallel",),
            vmem_limit_bytes=vmem_limit,
        ),
        cost_estimate=cost,
    )(x_pad, b_packed, *weights)

    return out_padded[:B, :out_dim]


def init_mlp_params(key, in_dim, out_dim, width):
    """Deterministic init mimicking torch.nn.Linear (U[-1/sqrt(fan_in), 1/sqrt(fan_in)])."""
    dims = [(in_dim, width), (width, width), (width, width), (width, width),
            (width, out_dim)]
    params = {}
    for layer, (fan_in, fan_out) in enumerate(dims, start=1):
        key, kw, kb = jax.random.split(key, 3)
        bound = 1.0 / jnp.sqrt(jnp.asarray(fan_in, jnp.float32))
        params[f"w{layer}"] = jax.random.uniform(
            kw, (fan_in, fan_out), jnp.float32, minval=-bound, maxval=bound)
        params[f"b{layer}"] = jax.random.uniform(
            kb, (1, fan_out), jnp.float32, minval=-bound, maxval=bound)
    return params


def mlp_reference(x, params, *, activation: bool):
    h = x
    for layer in range(1, 5):
        h = jnp.maximum(h @ params[f"w{layer}"] + params[f"b{layer}"], 0.0)
    out = h @ params["w5"] + params["b5"]
    if activation:
        out = jnp.tanh(out)
    return 3.0 * out


if __name__ == "__main__":
    key = jax.random.PRNGKey(0)

    configs = [
        # (batch, in_dim, out_dim, width)
        (8, 4, 4, 32),      # toy RealNVP coupling-net shape (grid = 1)
        (300, 2, 2, 64),    # non-divisible batch -> exercises padding, grid > 1
    ]

    for (batch, in_dim, out_dim, width) in configs:
        key, k_params, k_x = jax.random.split(key, 3)
        params = init_mlp_params(k_params, in_dim, out_dim, width)
        x = jax.random.normal(k_x, (batch, in_dim), jnp.float32)

        for act in (True, False):
            ref = mlp_reference(x, params, activation=act)

            # Exact-semantics path: f32 operands on the MXU.
            out_f32 = jax.block_until_ready(
                mlp_forward(x, params, activation=act,
                            compute_dtype=jnp.float32))
            assert out_f32.shape == (batch, out_dim)
            assert jnp.allclose(out_f32, ref, atol=1e-5, rtol=1e-5), (
                f"f32 mismatch (B={batch}, activation={act}): max err "
                f"{jnp.max(jnp.abs(out_f32 - ref))}")

            # Fast path: bf16 operands, f32 accumulation.
            out_bf16 = jax.block_until_ready(
                mlp_forward(x, params, activation=act,
                            compute_dtype=jnp.bfloat16))
            assert out_bf16.shape == (batch, out_dim)
            assert jnp.allclose(out_bf16, ref, atol=1e-1, rtol=5e-2), (
                f"bf16 mismatch (B={batch}, activation={act}): max err "
                f"{jnp.max(jnp.abs(out_bf16 - ref))}")

    print("KERNEL_OK")
</pallas_src>

<mosaic_0001>
module attributes {stable_mosaic.version = 11 : i64} {
  func.func @_mlp_kernel(%arg0: i32, %arg1: memref<8x128xf32, #tpu.memory_space<vmem>>, %arg2: memref<8x128xf32, #tpu.memory_space<vmem>>, %arg3: memref<128x128xf32, #tpu.memory_space<vmem>>, %arg4: memref<128x128xf32, #tpu.memory_space<vmem>>, %arg5: memref<128x128xf32, #tpu.memory_space<vmem>>, %arg6: memref<128x128xf32, #tpu.memory_space<vmem>>, %arg7: memref<128x128xf32, #tpu.memory_space<vmem>>, %arg8: memref<8x128xf32, #tpu.memory_space<vmem>>) attributes {dimension_semantics = [#tpu.dimension_semantics<parallel>], iteration_bounds = array<i64: 1>, scalar_prefetch = 0 : i64, scratch_operands = 0 : i64, tpu.core_type = #tpu.core_type<tc>, window_params = [{transform_indices = @transform_0, window_bounds = array<i64: 8, 128>}, {pipeline_mode = #tpu.pipeline_mode<synchronous>, transform_indices = @transform_1, window_bounds = array<i64: 8, 128>}, {pipeline_mode = #tpu.pipeline_mode<synchronous>, transform_indices = @transform_2, window_bounds = array<i64: 128, 128>}, {pipeline_mode = #tpu.pipeline_mode<synchronous>, transform_indices = @transform_3, window_bounds = array<i64: 128, 128>}, {pipeline_mode = #tpu.pipeline_mode<synchronous>, transform_indices = @transform_4, window_bounds = array<i64: 128, 128>}, {pipeline_mode = #tpu.pipeline_mode<synchronous>, transform_indices = @transform_5, window_bounds = array<i64: 128, 128>}, {pipeline_mode = #tpu.pipeline_mode<synchronous>, transform_indices = @transform_6, window_bounds = array<i64: 128, 128>}, {transform_indices = @transform_7, window_bounds = array<i64: 8, 128>}]} {
    %c0 = arith.constant 0 : index
    %c0_0 = arith.constant 0 : index
    %0 = vector.load %arg1[%c0, %c0_0] : memref<8x128xf32, #tpu.memory_space<vmem>>, vector<8x128xf32>
    %c0_1 = arith.constant 0 : index
    %c0_2 = arith.constant 0 : index
    %1 = vector.load %arg3[%c0_1, %c0_2] : memref<128x128xf32, #tpu.memory_space<vmem>>, vector<128x128xf32>
    %cst = arith.constant dense<0.000000e+00> : vector<8x128xf32>
    %2 = tpu.matmul %0, %1, %cst {dimension_numbers = #tpu.dot_dimension_numbers<[1], [0], [0], [1], [0, 0, 1, 1], [], []>} : vector<8x128xf32>, vector<128x128xf32>, vector<8x128xf32> -> vector<8x128xf32>
    %c0_3 = arith.constant 0 : index
    %c0_4 = arith.constant 0 : index
    %3 = vector.load %arg2[%c0_3, %c0_4] : memref<8x128xf32, #tpu.memory_space<vmem>>, vector<1x128xf32>
    %4 = vector.broadcast %3 : vector<1x128xf32> to vector<8x128xf32>
    %5 = arith.addf %2, %4 : vector<8x128xf32>
    %cst_5 = arith.constant 0.000000e+00 : f32
    %6 = vector.broadcast %cst_5 : f32 to vector<8x128xf32>
    %7 = arith.maximumf %5, %6 : vector<8x128xf32>
    %c0_6 = arith.constant 0 : index
    %c0_7 = arith.constant 0 : index
    %8 = vector.load %arg4[%c0_6, %c0_7] : memref<128x128xf32, #tpu.memory_space<vmem>>, vector<128x128xf32>
    %cst_8 = arith.constant dense<0.000000e+00> : vector<8x128xf32>
    %9 = tpu.matmul %7, %8, %cst_8 {dimension_numbers = #tpu.dot_dimension_numbers<[1], [0], [0], [1], [0, 0, 1, 1], [], []>} : vector<8x128xf32>, vector<128x128xf32>, vector<8x128xf32> -> vector<8x128xf32>
    %c1 = arith.constant 1 : index
    %c0_9 = arith.constant 0 : index
    %10 = vector.load %arg2[%c1, %c0_9] : memref<8x128xf32, #tpu.memory_space<vmem>>, vector<1x128xf32>
    %11 = vector.broadcast %10 : vector<1x128xf32> to vector<8x128xf32>
    %12 = arith.addf %9, %11 : vector<8x128xf32>
    %cst_10 = arith.constant 0.000000e+00 : f32
    %13 = vector.broadcast %cst_10 : f32 to vector<8x128xf32>
    %14 = arith.maximumf %12, %13 : vector<8x128xf32>
    %c0_11 = arith.constant 0 : index
    %c0_12 = arith.constant 0 : index
    %15 = vector.load %arg5[%c0_11, %c0_12] : memref<128x128xf32, #tpu.memory_space<vmem>>, vector<128x128xf32>
    %cst_13 = arith.constant dense<0.000000e+00> : vector<8x128xf32>
    %16 = tpu.matmul %14, %15, %cst_13 {dimension_numbers = #tpu.dot_dimension_numbers<[1], [0], [0], [1], [0, 0, 1, 1], [], []>} : vector<8x128xf32>, vector<128x128xf32>, vector<8x128xf32> -> vector<8x128xf32>
    %c2 = arith.constant 2 : index
    %c0_14 = arith.constant 0 : index
    %17 = vector.load %arg2[%c2, %c0_14] : memref<8x128xf32, #tpu.memory_space<vmem>>, vector<1x128xf32>
    %18 = vector.broadcast %17 : vector<1x128xf32> to vector<8x128xf32>
    %19 = arith.addf %16, %18 : vector<8x128xf32>
    %cst_15 = arith.constant 0.000000e+00 : f32
    %20 = vector.broadcast %cst_15 : f32 to vector<8x128xf32>
    %21 = arith.maximumf %19, %20 : vector<8x128xf32>
    %c0_16 = arith.constant 0 : index
    %c0_17 = arith.constant 0 : index
    %22 = vector.load %arg6[%c0_16, %c0_17] : memref<128x128xf32, #tpu.memory_space<vmem>>, vector<128x128xf32>
    %cst_18 = arith.constant dense<0.000000e+00> : vector<8x128xf32>
    %23 = tpu.matmul %21, %22, %cst_18 {dimension_numbers = #tpu.dot_dimension_numbers<[1], [0], [0], [1], [0, 0, 1, 1], [], []>} : vector<8x128xf32>, vector<128x128xf32>, vector<8x128xf32> -> vector<8x128xf32>
    %c3 = arith.constant 3 : index
    %c0_19 = arith.constant 0 : index
    %24 = vector.load %arg2[%c3, %c0_19] : memref<8x128xf32, #tpu.memory_space<vmem>>, vector<1x128xf32>
    %25 = vector.broadcast %24 : vector<1x128xf32> to vector<8x128xf32>
    %26 = arith.addf %23, %25 : vector<8x128xf32>
    %cst_20 = arith.constant 0.000000e+00 : f32
    %27 = vector.broadcast %cst_20 : f32 to vector<8x128xf32>
    %28 = arith.maximumf %26, %27 : vector<8x128xf32>
    %c0_21 = arith.constant 0 : index
    %c0_22 = arith.constant 0 : index
    %29 = vector.load %arg7[%c0_21, %c0_22] : memref<128x128xf32, #tpu.memory_space<vmem>>, vector<128x128xf32>
    %cst_23 = arith.constant dense<0.000000e+00> : vector<8x128xf32>
    %30 = tpu.matmul %28, %29, %cst_23 {dimension_numbers = #tpu.dot_dimension_numbers<[1], [0], [0], [1], [0, 0, 1, 1], [], []>} : vector<8x128xf32>, vector<128x128xf32>, vector<8x128xf32> -> vector<8x128xf32>
    %c4 = arith.constant 4 : index
    %c0_24 = arith.constant 0 : index
    %31 = vector.load %arg2[%c4, %c0_24] : memref<8x128xf32, #tpu.memory_space<vmem>>, vector<1x128xf32>
    %32 = vector.broadcast %31 : vector<1x128xf32> to vector<8x128xf32>
    %33 = arith.addf %30, %32 : vector<8x128xf32>
    %34 = math.tanh %33 : vector<8x128xf32>
    %cst_25 = arith.constant 3.000000e+00 : f32
    %35 = vector.broadcast %cst_25 : f32 to vector<8x128xf32>
    %36 = arith.mulf %35, %34 : vector<8x128xf32>
    %c0_26 = arith.constant 0 : index
    %c0_27 = arith.constant 0 : index
    %37 = vector.load %arg8[%c0_26, %c0_27] : memref<8x128xf32, #tpu.memory_space<vmem>>, vector<8x128xf32>
    tpu.vector_store %arg8[%c0_26, %c0_27], %36 {strides = array<i32>} : memref<8x128xf32, #tpu.memory_space<vmem>>, vector<8x128xf32>,
    return
  }
  func.func @transform_0(%arg0: i32) -> (i32, i32) {
    %c0_i32 = arith.constant 0 : i32
    %c0_i32_0 = arith.constant 0 : i32
    return %arg0, %c0_i32 : i32, i32
  }
  func.func @transform_1(%arg0: i32) -> (i32, i32) {
    %c0_i32 = arith.constant 0 : i32
    %c0_i32_0 = arith.constant 0 : i32
    %c0_i32_1 = arith.constant 0 : i32
    return %c0_i32, %c0_i32_0 : i32, i32
  }
  func.func @transform_2(%arg0: i32) -> (i32, i32) {
    %c0_i32 = arith.constant 0 : i32
    %c0_i32_0 = arith.constant 0 : i32
    %c0_i32_1 = arith.constant 0 : i32
    return %c0_i32, %c0_i32_0 : i32, i32
  }
  func.func @transform_3(%arg0: i32) -> (i32, i32) {
    %c0_i32 = arith.constant 0 : i32
    %c0_i32_0 = arith.constant 0 : i32
    %c0_i32_1 = arith.constant 0 : i32
    return %c0_i32, %c0_i32_0 : i32, i32
  }
  func.func @transform_4(%arg0: i32) -> (i32, i32) {
    %c0_i32 = arith.constant 0 : i32
    %c0_i32_0 = arith.constant 0 : i32
    %c0_i32_1 = arith.constant 0 : i32
    return %c0_i32, %c0_i32_0 : i32, i32
  }
  func.func @transform_5(%arg0: i32) -> (i32, i32) {
    %c0_i32 = arith.constant 0 : i32
    %c0_i32_0 = arith.constant 0 : i32
    %c0_i32_1 = arith.constant 0 : i32
    return %c0_i32, %c0_i32_0 : i32, i32
  }
  func.func @transform_6(%arg0: i32) -> (i32, i32) {
    %c0_i32 = arith.constant 0 : i32
    %c0_i32_0 = arith.constant 0 : i32
    %c0_i32_1 = arith.constant 0 : i32
    return %c0_i32, %c0_i32_0 : i32, i32
  }
  func.func @transform_7(%arg0: i32) -> (i32, i32) {
    %c0_i32 = arith.constant 0 : i32
    %c0_i32_0 = arith.constant 0 : i32
    return %arg0, %c0_i32 : i32, i32
  }
}

</mosaic_0001>

<llo_original>
// kernel: tpu_custom_call.1
$region0: #{tpu_custom_call.1}
  #allocation0 [shape = 'u32[]', space=smem, size = 0x4, offset = 0x4, fixed_abs, tag = 'smem constant byte address 0x4 - core index']
  #allocation1 [shape = 'u32[72,128]{1,0:T(1,128)}', space=vmem, size = 0x9000, scoped, tag = 'internal scratch']
  %s0 = inlined_call_operand.hbm [shape: f32[8,128], index: 0, kind: input, shape index: {}]
  %s1 = inlined_call_operand.hbm [shape: f32[8,128], index: 1, kind: input, shape index: {}]
  %s2 = inlined_call_operand.hbm [shape: f32[128,128], index: 2, kind: input, shape index: {}]
  %s3 = inlined_call_operand.hbm [shape: f32[128,128], index: 3, kind: input, shape index: {}]
  %s4 = inlined_call_operand.hbm [shape: f32[128,128], index: 4, kind: input, shape index: {}]
  %s5 = inlined_call_operand.hbm [shape: f32[128,128], index: 5, kind: input, shape index: {}]
  %s6 = inlined_call_operand.hbm [shape: f32[128,128], index: 6, kind: input, shape index: {}]
  %s7 = inlined_call_operand.hbm [shape: f32[8,128], index: 7, kind: output, shape index: {}]
  %s8 = sld [smem:[#allocation0]]
  $region66: #{tpu_custom_call.1} parent=0
    _
  %s10 = ssub.s32 1, %s8
  %s11 = scalar_select 0, %s10, %s8
  $region1: #{tpu_custom_call.1} parent=0
    #allocation2 [shape = 'u8[4096]{0}', space=vmem, size = 0x1000, scoped, tag = 'input window, operand 0, single buffered']
    #allocation3 [shape = 's32[1]{0}', space=sflag, size = 0x4, scoped, tag = 'scoped memory for tpu_custom_call.1']
    #allocation4 [shape = 's32[1]{0}', space=sflag, size = 0x4, scoped, tag = 'scoped memory for tpu_custom_call.1']
    #allocation5 [shape = 'u8[4096]{0}', space=vmem, size = 0x1000, scoped, tag = 'input window, operand 1, single buffered']
    #allocation6 [shape = 's32[1]{0}', space=sflag, size = 0x4, scoped, tag = 'scoped memory for tpu_custom_call.1']
    #allocation7 [shape = 'u8[65536]{0}', space=vmem, size = 0x10000, scoped, tag = 'input window, operand 2, single buffered']
    #allocation8 [shape = 'u8[65536]{0}', space=vmem, size = 0x10000, scoped, tag = 'input window, operand 3, single buffered']
    #allocation9 [shape = 's32[1]{0}', space=sflag, size = 0x4, scoped, tag = 'scoped memory for tpu_custom_call.1']
    #allocation10 [shape = 'u8[65536]{0}', space=vmem, size = 0x10000, scoped, tag = 'input window, operand 4, single buffered']
    #allocation11 [shape = 'u8[65536]{0}', space=vmem, size = 0x10000, scoped, tag = 'input window, operand 5, single buffered']
    #allocation12 [shape = 's32[1]{0}', space=sflag, size = 0x4, scoped, tag = 'scoped memory for tpu_custom_call.1']
    #allocation13 [shape = 'u8[65536]{0}', space=vmem, size = 0x10000, scoped, tag = 'input window, operand 6, single buffered']
    #allocation14 [shape = 'u8[4096]{0}', space=vmem, size = 0x1000, scoped, tag = 'output window, operand 0, single buffered']
    %12 = vsyncpa [#allocation3], 0
    %13 = vsyncpa [#allocation6], 0
    %14 = vsyncpa [#allocation9], 0
    %15 = vsyncpa [#allocation12], 0
    %16 = vsyncpa [#allocation4], 0
    // Predicated region
    $region2: #{tpu_custom_call.1} parent=1 // pred_check
      _
    $region3: #{tpu_custom_call.1} parent=1 // pred_check_branch
      %18 = sbr.rel (0) target = $region5
    $region4: #{tpu_custom_call.1} parent=1 // pred_region
      %20 = vsyncadd [#allocation3], 0
      %s22 = sshll.u32 %s0, 4
      %s23 = int_to_ptr.hbm [resolvable:$true] %s22
      %s24 = sshll.u32 [#allocation2], 4
      %s25 = int_to_ptr.vmem [resolvable:$true] %s24
      %27 = dma.hbm_to_vmem [thread:$0]  %s23, 128, %s25, [#allocation3]
    $region5: #{tpu_custom_call.1} parent=1 // pred_fallthru
      _
    // Predicated region
    $region6: #{tpu_custom_call.1} parent=1 // pred_check
      _
    $region7: #{tpu_custom_call.1} parent=1 // pred_check_branch
      %29 = sbr.rel (0) target = $region9
    $region8: #{tpu_custom_call.1} parent=1 // pred_region
      %31 = vsyncadd [#allocation6], 0
      %s33 = sshll.u32 %s1, 4
      %s34 = int_to_ptr.hbm [resolvable:$true] %s33
      %s35 = sshll.u32 [#allocation5], 4
      %s36 = int_to_ptr.vmem [resolvable:$true] %s35
      %38 = dma.hbm_to_vmem [thread:$0]  %s34, 128, %s36, [#allocation6]
    $region9: #{tpu_custom_call.1} parent=1 // pred_fallthru
      _
    // Predicated region
    $region10: #{tpu_custom_call.1} parent=1 // pred_check
      _
    $region11: #{tpu_custom_call.1} parent=1 // pred_check_branch
      %40 = sbr.rel (0) target = $region13
    $region12: #{tpu_custom_call.1} parent=1 // pred_region
      %42 = vsyncadd [#allocation6], 0
      %s43 = sshll.u32 %s2, 4
      %s44 = int_to_ptr.hbm [resolvable:$true] %s43
      %s45 = sshll.u32 [#allocation7], 4
      %s46 = int_to_ptr.vmem [resolvable:$true] %s45
      %51 = dma.hbm_to_vmem [thread:$0]  %s44, 2048, %s46, [#allocation6], 128, 128, 8
    $region13: #{tpu_custom_call.1} parent=1 // pred_fallthru
      _
    // Predicated region
    $region14: #{tpu_custom_call.1} parent=1 // pred_check
      _
    $region15: #{tpu_custom_call.1} parent=1 // pred_check_branch
      %53 = sbr.rel (0) target = $region17
    $region16: #{tpu_custom_call.1} parent=1 // pred_region
      %55 = vsyncadd [#allocation9], 0
      %s56 = sshll.u32 %s3, 4
      %s57 = int_to_ptr.hbm [resolvable:$true] %s56
      %s58 = sshll.u32 [#allocation8], 4
      %s59 = int_to_ptr.vmem [resolvable:$true] %s58
      %64 = dma.hbm_to_vmem [thread:$0]  %s57, 2048, %s59, [#allocation9], 128, 128, 8
    $region17: #{tpu_custom_call.1} parent=1 // pred_fallthru
      _
    // Predicated region
    $region18: #{tpu_custom_call.1} parent=1 // pred_check
      _
    $region19: #{tpu_custom_call.1} parent=1 // pred_check_branch
      %66 = sbr.rel (0) target = $region21
    $region20: #{tpu_custom_call.1} parent=1 // pred_region
      %68 = vsyncadd [#allocation9], 0
      %s69 = sshll.u32 %s4, 4
      %s70 = int_to_ptr.hbm [resolvable:$true] %s69
      %s71 = sshll.u32 [#allocation10], 4
      %s72 = int_to_ptr.vmem [resolvable:$true] %s71
      %77 = dma.hbm_to_vmem [thread:$0]  %s70, 2048, %s72, [#allocation9], 128, 128, 8
    $region21: #{tpu_custom_call.1} parent=1 // pred_fallthru
      _
    // Predicated region
    $region22: #{tpu_custom_call.1} parent=1 // pred_check
      _
    $region23: #{tpu_custom_call.1} parent=1 // pred_check_branch
      %79 = sbr.rel (0) target = $region25
    $region24: #{tpu_custom_call.1} parent=1 // pred_region
      %81 = vsyncadd [#allocation12], 0
      %s82 = sshll.u32 %s5, 4
      %s83 = int_to_ptr.hbm [resolvable:$true] %s82
      %s84 = sshll.u32 [#allocation11], 4
      %s85 = int_to_ptr.vmem [resolvable:$true] %s84
      %90 = dma.hbm_to_vmem [thread:$0]  %s83, 2048, %s85, [#allocation12], 128, 128, 8
    $region25: #{tpu_custom_call.1} parent=1 // pred_fallthru
      _
    // Predicated region
    $region26: #{tpu_custom_call.1} parent=1 // pred_check
      _
    $region27: #{tpu_custom_call.1} parent=1 // pred_check_branch
      %92 = sbr.rel (0) target = $region29
    $region28: #{tpu_custom_call.1} parent=1 // pred_region
      %94 = vsyncadd [#allocation12], 0
      %s95 = sshll.u32 %s6, 4
      %s96 = int_to_ptr.hbm [resolvable:$true] %s95
      %s97 = sshll.u32 [#allocation13], 4
      %s98 = int_to_ptr.vmem [resolvable:$true] %s97
      %103 = dma.hbm_to_vmem [thread:$0]  %s96, 2048, %s98, [#allocation12], 128, 128, 8
    $region29: #{tpu_custom_call.1} parent=1 // pred_fallthru
      _
    // Predicated region
    $region30: #{tpu_custom_call.1} parent=1 // pred_check
      _
    $region31: #{tpu_custom_call.1} parent=1 // pred_check_branch
      %105 = sbr.rel (0) target = $region33
    $region32: #{tpu_custom_call.1} parent=1 // pred_region
      %107 = dma.done [#allocation3], 128
    $region33: #{tpu_custom_call.1} parent=1 // pred_fallthru
      _
    // Predicated region
    $region34: #{tpu_custom_call.1} parent=1 // pred_check
      _
    $region35: #{tpu_custom_call.1} parent=1 // pred_check_branch
      %109 = sbr.rel (0) target = $region37
    $region36: #{tpu_custom_call.1} parent=1 // pred_region
      %111 = dma.done [#allocation6], 128
    $region37: #{tpu_custom_call.1} parent=1 // pred_fallthru
      _
    // Predicated region
    $region38: #{tpu_custom_call.1} parent=1 // pred_check
      _
    $region39: #{tpu_custom_call.1} parent=1 // pred_check_branch
      %113 = sbr.rel (0) target = $region41
    $region40: #{tpu_custom_call.1} parent=1 // pred_region
      %115 = dma.done [#allocation6], 2048
    $region41: #{tpu_custom_call.1} parent=1 // pred_fallthru
      _
    // Predicated region
    $region42: #{tpu_custom_call.1} parent=1 // pred_check
      _
    $region43: #{tpu_custom_call.1} parent=1 // pred_check_branch
      %117 = sbr.rel (0) target = $region45
    $region44: #{tpu_custom_call.1} parent=1 // pred_region
      %119 = dma.done [#allocation9], 2048
    $region45: #{tpu_custom_call.1} parent=1 // pred_fallthru
      _
    // Predicated region
    $region46: #{tpu_custom_call.1} parent=1 // pred_check
      _
    $region47: #{tpu_custom_call.1} parent=1 // pred_check_branch
      %121 = sbr.rel (0) target = $region49
    $region48: #{tpu_custom_call.1} parent=1 // pred_region
      %123 = dma.done [#allocation9], 2048
    $region49: #{tpu_custom_call.1} parent=1 // pred_fallthru
      _
    // Predicated region
    $region50: #{tpu_custom_call.1} parent=1 // pred_check
      _
    $region51: #{tpu_custom_call.1} parent=1 // pred_check_branch
      %125 = sbr.rel (0) target = $region53
    $region52: #{tpu_custom_call.1} parent=1 // pred_region
      %127 = dma.done [#allocation12], 2048
    $region53: #{tpu_custom_call.1} parent=1 // pred_fallthru
      _
    // Predicated region
    $region54: #{tpu_custom_call.1} parent=1 // pred_check
      _
    $region55: #{tpu_custom_call.1} parent=1 // pred_check_branch
      %129 = sbr.rel (0) target = $region57
    $region56: #{tpu_custom_call.1} parent=1 // pred_region
      %131 = dma.done [#allocation12], 2048
    $region57: #{tpu_custom_call.1} parent=1 // pred_fallthru
      _
    %v132 = vld [vmem:[#allocation2] sm:$0xff]
    %v133 = vld [vmem:[#allocation7] sm:$0xff]
    %v134 = vld [vmem:[#allocation7 + $0x8] sm:$0xff]
    %v135 = vld [vmem:[#allocation7 + $0x10] sm:$0xff]
    %v136 = vld [vmem:[#allocation7 + $0x18] sm:$0xff]
    %v137 = vld [vmem:[#allocation7 + $0x20] sm:$0xff]
    %v138 = vld [vmem:[#allocation7 + $0x28] sm:$0xff]
    %v139 = vld [vmem:[#allocation7 + $0x30] sm:$0xff]
    %v140 = vld [vmem:[#allocation7 + $0x38] sm:$0xff]
    %v141 = vld [vmem:[#allocation7 + $0x40] sm:$0xff]
    %v142 = vld [vmem:[#allocation7 + $0x48] sm:$0xff]
    %v143 = vld [vmem:[#allocation7 + $0x50] sm:$0xff]
    %v144 = vld [vmem:[#allocation7 + $0x58] sm:$0xff]
    %v145 = vld [vmem:[#allocation7 + $0x60] sm:$0xff]
    %v146 = vld [vmem:[#allocation7 + $0x68] sm:$0xff]
    %v147 = vld [vmem:[#allocation7 + $0x70] sm:$0xff]
    %v148 = vld [vmem:[#allocation7 + $0x78] sm:$0xff]
    %v149 = vld [vmem:[#allocation5] sm:$0x1]
    %v150 = vperm.slane %v149, 0
    %151 = vmatpush.msra.mxu0 %v148
    %152 = vmatpush.msra.mxu0 %v147
    %153 = vmatpush.msra.mxu0 %v146
    %154 = vmatpush.msra.mxu0 %v145
    %155 = vmatpush.msra.mxu0 %v144
    %156 = vmatpush.msra.mxu0 %v143
    %157 = vmatpush.msra.mxu0 %v142
    %158 = vmatpush.msra.mxu0 %v141
    %159 = vmatpush.msra.mxu0 %v140
    %160 = vmatpush.msra.mxu0 %v139
    %161 = vmatpush.msra.mxu0 %v138
    %162 = vmatpush.msra.mxu0 %v137
    %163 = vmatpush.msra.mxu0 %v136
    %164 = vmatpush.msra.mxu0 %v135
    %165 = vmatpush.msra.mxu0 %v134
    %166 = vmatpush.msra.mxu0 %v133
    %167 = vmatmul.f32.gmra.mxu0 %v132
    %v168 = vpop.f32.mrf.mxu0
    %v169 = vadd.f32 %v150, %v168
    %170 = vdwg.mxu0
    %v171 = vmax.f32 %v169, 0.0
    %v172 = vld [vmem:[#allocation8] sm:$0xff]
    %v173 = vld [vmem:[#allocation8 + $0x8] sm:$0xff]
    %v174 = vld [vmem:[#allocation8 + $0x10] sm:$0xff]
    %v175 = vld [vmem:[#allocation8 + $0x18] sm:$0xff]
    %v176 = vld [vmem:[#allocation8 + $0x20] sm:$0xff]
    %v177 = vld [vmem:[#allocation8 + $0x28] sm:$0xff]
    %v178 = vld [vmem:[#allocation8 + $0x30] sm:$0xff]
    %v179 = vld [vmem:[#allocation8 + $0x38] sm:$0xff]
    %v180 = vld [vmem:[#allocation8 + $0x40] sm:$0xff]
    %v181 = vld [vmem:[#allocation8 + $0x48] sm:$0xff]
    %v182 = vld [vmem:[#allocation8 + $0x50] sm:$0xff]
    %v183 = vld [vmem:[#allocation8 + $0x58] sm:$0xff]
    %v184 = vld [vmem:[#allocation8 + $0x60] sm:$0xff]
    %v185 = vld [vmem:[#allocation8 + $0x68] sm:$0xff]
    %v186 = vld [vmem:[#allocation8 + $0x70] sm:$0xff]
    %v187 = vld [vmem:[#allocation8 + $0x78] sm:$0xff]
    %v188 = vld [vmem:[#allocation5 + $0x1] sm:$0x1]
    %v189 = vperm.slane %v188, 0
    %190 = vmatpush.msra.mxu0 %v187
    %191 = vmatpush.msra.mxu0 %v186
    %192 = vmatpush.msra.mxu0 %v185
    %193 = vmatpush.msra.mxu0 %v184
    %194 = vmatpush.msra.mxu0 %v183
    %195 = vmatpush.msra.mxu0 %v182
    %196 = vmatpush.msra.mxu0 %v181
    %197 = vmatpush.msra.mxu0 %v180
    %198 = vmatpush.msra.mxu0 %v179
    %199 = vmatpush.msra.mxu0 %v178
    %200 = vmatpush.msra.mxu0 %v177
    %201 = vmatpush.msra.mxu0 %v176
    %202 = vmatpush.msra.mxu0 %v175
    %203 = vmatpush.msra.mxu0 %v174
    %204 = vmatpush.msra.mxu0 %v173
    %205 = vmatpush.msra.mxu0 %v172
    %206 = vmatmul.f32.gmra.mxu0 %v171
    %v207 = vpop.f32.mrf.mxu0
    %v208 = vadd.f32 %v189, %v207
    %209 = vdwg.mxu0
    %v210 = vmax.f32 %v208, 0.0
    %v211 = vld [vmem:[#allocation10] sm:$0xff]
    %v212 = vld [vmem:[#allocation10 + $0x8] sm:$0xff]
    %v213 = vld [vmem:[#allocation10 + $0x10] sm:$0xff]
    %v214 = vld [vmem:[#allocation10 + $0x18] sm:$0xff]
    %v215 = vld [vmem:[#allocation10 + $0x20] sm:$0xff]
    %v216 = vld [vmem:[#allocation10 + $0x28] sm:$0xff]
    %v217 = vld [vmem:[#allocation10 + $0x30] sm:$0xff]
    %v218 = vld [vmem:[#allocation10 + $0x38] sm:$0xff]
    %v219 = vld [vmem:[#allocation10 + $0x40] sm:$0xff]
    %v220 = vld [vmem:[#allocation10 + $0x48] sm:$0xff]
    %v221 = vld [vmem:[#allocation10 + $0x50] sm:$0xff]
    %v222 = vld [vmem:[#allocation10 + $0x58] sm:$0xff]
    %v223 = vld [vmem:[#allocation10 + $0x60] sm:$0xff]
    %v224 = vld [vmem:[#allocation10 + $0x68] sm:$0xff]
    %v225 = vld [vmem:[#allocation10 + $0x70] sm:$0xff]
    %v226 = vld [vmem:[#allocation10 + $0x78] sm:$0xff]
    %v227 = vld [vmem:[#allocation5 + $0x2] sm:$0x1]
    %v228 = vperm.slane %v227, 0
    %229 = vmatpush.msra.mxu0 %v226
    %230 = vmatpush.msra.mxu0 %v225
    %231 = vmatpush.msra.mxu0 %v224
    %232 = vmatpush.msra.mxu0 %v223
    %233 = vmatpush.msra.mxu0 %v222
    %234 = vmatpush.msra.mxu0 %v221
    %235 = vmatpush.msra.mxu0 %v220
    %236 = vmatpush.msra.mxu0 %v219
    %237 = vmatpush.msra.mxu0 %v218
    %238 = vmatpush.msra.mxu0 %v217
    %239 = vmatpush.msra.mxu0 %v216
    %240 = vmatpush.msra.mxu0 %v215
    %241 = vmatpush.msra.mxu0 %v214
    %242 = vmatpush.msra.mxu0 %v213
    %243 = vmatpush.msra.mxu0 %v212
    %244 = vmatpush.msra.mxu0 %v211
    %245 = vmatmul.f32.gmra.mxu0 %v210
    %v246 = vpop.f32.mrf.mxu0
    %v247 = vadd.f32 %v228, %v246
    %248 = vdwg.mxu0
    %v249 = vmax.f32 %v247, 0.0
    %v250 = vld [vmem:[#allocation11] sm:$0xff]
    %v251 = vld [vmem:[#allocation11 + $0x8] sm:$0xff]
    %v252 = vld [vmem:[#allocation11 + $0x10] sm:$0xff]
    %v253 = vld [vmem:[#allocation11 + $0x18] sm:$0xff]
    %v254 = vld [vmem:[#allocation11 + $0x20] sm:$0xff]
    %v255 = vld [vmem:[#allocation11 + $0x28] sm:$0xff]
    %v256 = vld [vmem:[#allocation11 + $0x30] sm:$0xff]
    %v257 = vld [vmem:[#allocation11 + $0x38] sm:$0xff]
    %v258 = vld [vmem:[#allocation11 + $0x40] sm:$0xff]
    %v259 = vld [vmem:[#allocation11 + $0x48] sm:$0xff]
    %v260 = vld [vmem:[#allocation11 + $0x50] sm:$0xff]
    %v261 = vld [vmem:[#allocation11 + $0x58] sm:$0xff]
    %v262 = vld [vmem:[#allocation11 + $0x60] sm:$0xff]
    %v263 = vld [vmem:[#allocation11 + $0x68] sm:$0xff]
    %v264 = vld [vmem:[#allocation11 + $0x70] sm:$0xff]
    %v265 = vld [vmem:[#allocation11 + $0x78] sm:$0xff]
    %v266 = vld [vmem:[#allocation5 + $0x3] sm:$0x1]
    %v267 = vperm.slane %v266, 0
    %268 = vmatpush.msra.mxu0 %v265
    %269 = vmatpush.msra.mxu0 %v264
    %270 = vmatpush.msra.mxu0 %v263
    %271 = vmatpush.msra.mxu0 %v262
    %272 = vmatpush.msra.mxu0 %v261
    %273 = vmatpush.msra.mxu0 %v260
    %274 = vmatpush.msra.mxu0 %v259
    %275 = vmatpush.msra.mxu0 %v258
    %276 = vmatpush.msra.mxu0 %v257
    %277 = vmatpush.msra.mxu0 %v256
    %278 = vmatpush.msra.mxu0 %v255
    %279 = vmatpush.msra.mxu0 %v254
    %280 = vmatpush.msra.mxu0 %v253
    %281 = vmatpush.msra.mxu0 %v252
    %282 = vmatpush.msra.mxu0 %v251
    %283 = vmatpush.msra.mxu0 %v250
    %284 = vmatmul.f32.gmra.mxu0 %v249
    %v285 = vpop.f32.mrf.mxu0
    %v286 = vadd.f32 %v267, %v285
    %287 = vdwg.mxu0
    %v288 = vmax.f32 %v286, 0.0
    %v289 = vld [vmem:[#allocation13] sm:$0xff]
    %v290 = vld [vmem:[#allocation13 + $0x8] sm:$0xff]
    %v291 = vld [vmem:[#allocation13 + $0x10] sm:$0xff]
    %v292 = vld [vmem:[#allocation13 + $0x18] sm:$0xff]
    %v293 = vld [vmem:[#allocation13 + $0x20] sm:$0xff]
    %v294 = vld [vmem:[#allocation13 + $0x28] sm:$0xff]
    %v295 = vld [vmem:[#allocation13 + $0x30] sm:$0xff]
    %v296 = vld [vmem:[#allocation13 + $0x38] sm:$0xff]
    %v297 = vld [vmem:[#allocation13 + $0x40] sm:$0xff]
    %v298 = vld [vmem:[#allocation13 + $0x48] sm:$0xff]
    %v299 = vld [vmem:[#allocation13 + $0x50] sm:$0xff]
    %v300 = vld [vmem:[#allocation13 + $0x58] sm:$0xff]
    %v301 = vld [vmem:[#allocation13 + $0x60] sm:$0xff]
    %v302 = vld [vmem:[#allocation13 + $0x68] sm:$0xff]
    %v303 = vld [vmem:[#allocation13 + $0x70] sm:$0xff]
    %v304 = vld [vmem:[#allocation13 + $0x78] sm:$0xff]
    %v305 = vld [vmem:[#allocation5 + $0x4] sm:$0x1]
    %v306 = vperm.slane %v305, 0
    %307 = vmatpush.msra.mxu0 %v304
    %308 = vmatpush.msra.mxu0 %v303
    %309 = vmatpush.msra.mxu0 %v302
    %310 = vmatpush.msra.mxu0 %v301
    %311 = vmatpush.msra.mxu0 %v300
    %312 = vmatpush.msra.mxu0 %v299
    %313 = vmatpush.msra.mxu0 %v298
    %314 = vmatpush.msra.mxu0 %v297
    %315 = vmatpush.msra.mxu0 %v296
    %316 = vmatpush.msra.mxu0 %v295
    %317 = vmatpush.msra.mxu0 %v294
    %318 = vmatpush.msra.mxu0 %v293
    %319 = vmatpush.msra.mxu0 %v292
    %320 = vmatpush.msra.mxu0 %v291
    %321 = vmatpush.msra.mxu0 %v290
    %322 = vmatpush.msra.mxu0 %v289
    %323 = vmatmul.f32.gmra.mxu0 %v288
    %v324 = vpop.f32.mrf.mxu0
    %v325 = vadd.f32 %v306, %v324
    %326 = vdwg.mxu0
    %v327 = vtanh.pop %v325
    %v328 = vmul.f32 %v327, 3.0
    %329 = vst [vmem:[#allocation14] sm:$0xff] %v328
    // Predicated region
    $region58: #{tpu_custom_call.1} parent=1 // pred_check
      _
    $region59: #{tpu_custom_call.1} parent=1 // pred_check_branch
      %331 = sbr.rel (0) target = $region61
    $region60: #{tpu_custom_call.1} parent=1 // pred_region
      %333 = vsyncadd [#allocation4], 0
      %s335 = sshll.u32 [#allocation14], 4
      %s336 = int_to_ptr.vmem [resolvable:$true] %s335
      %s337 = sshll.u32 %s7, 4
      %s338 = int_to_ptr.hbm [resolvable:$true] %s337
      %340 = dma.vmem_to_hbm [thread:$0]  %s336, 128, %s338, [#allocation4]
    $region61: #{tpu_custom_call.1} parent=1 // pred_fallthru
      _
    // Predicated region
    $region62: #{tpu_custom_call.1} parent=1 // pred_check
      _
    $region63: #{tpu_custom_call.1} parent=1 // pred_check_branch
      %342 = sbr.rel (0) target = $region65
    $region64: #{tpu_custom_call.1} parent=1 // pred_region
      %344 = dma.done [#allocation4], 128
    $region65: #{tpu_custom_call.1} parent=1 // pred_fallthru
      _
    %345 = vsyncpa [#allocation3], 1
    %346 = vsyncpa [#allocation6], 1
    %347 = vsyncpa [#allocation9], 1
    %348 = vsyncpa [#allocation12], 1
    %349 = vsyncpa [#allocation4], 1

</llo_original>
